<compile_context>
chip_gen: v7x
topology: tpu7x:2x2x1
jax: 0.10.0
libtpu: 0.0.40
codegen_flags: <defaults>
</compile_context>

<pallas_src>
import jax
import jax.numpy as jnp
from jax.experimental import pallas as pl
from jax.experimental.pallas import tpu as pltpu


# ----------------------------------------------------------------------------
# Kernel: one (Cin, tHW) spatial tile of one batch element -> (Cout, tHW).
# ----------------------------------------------------------------------------
def _dssd_kernel(x_ref, wcat_ref, b1a_ref, w1b_ref, b1b_ref, w1c_ref,
                 bout_ref, o_ref):
    # x arrives in its native HBM dtype (e.g. f32); cast to the MXU compute
    # dtype *inside* the kernel so the wrapper never does a separate cast pass.
    x = x_ref[0].astype(wcat_ref.dtype)                      # (Cin, tHW)
    hid = b1a_ref.shape[0]                                   # padded to mult of 8

    # conv1a + conv2 fused: a single MXU pass over x with concatenated weights.
    z = jnp.dot(wcat_ref[...], x, preferred_element_type=jnp.float32)

    h = jnp.maximum(z[:hid, :] + b1a_ref[...], 0.0)          # conv1a epilogue (f32)
    resid = z[hid:, :]                                       # conv2 branch (bias in bout)

    # conv1b: matmul + bias + ReLU
    h = jnp.dot(w1b_ref[...], h.astype(w1b_ref.dtype),
                preferred_element_type=jnp.float32)
    h = jnp.maximum(h + b1b_ref[...], 0.0)

    # conv1c + residual + folded (b1c + b2) bias
    y = jnp.dot(w1c_ref[...], h.astype(w1c_ref.dtype),
                preferred_element_type=jnp.float32)
    o_ref[0] = (y + resid + bout_ref[...]).astype(o_ref.dtype)   # lane-dense store


# ----------------------------------------------------------------------------
# Parameter folding: eval-mode BN scale -> weight columns, biases kept,
# conv1a/conv2 weights concatenated, hid padded to a multiple of 8 so the
# sublane split of z is vreg-aligned for any out_planes.
# ----------------------------------------------------------------------------
def _fold_params(params, compute_dtype=jnp.bfloat16):
    (w1a, s1a, b1a, w1b, s1b, b1b, w1c, s1c, b1c, w2, s2, b2) = params
    hid = w1a.shape[1]
    Cout = w1c.shape[1]
    hid_pad = ((hid + 7) // 8) * 8

    w1a_f = (w1a * s1a[None, :]).T            # (hid,  Cin)
    w2_f = (w2 * s2[None, :]).T               # (Cout, Cin)
    w1b_f = (w1b * s1b[None, :]).T            # (hid,  hid)
    w1c_f = (w1c * s1c[None, :]).T            # (Cout, hid)
    b1a_f, b1b_f = b1a, b1b

    if hid_pad != hid:
        p = hid_pad - hid
        # Zero-padded rows/cols: padded hidden channels are exactly 0 through
        # the whole chain, so the math is unchanged.
        w1a_f = jnp.pad(w1a_f, ((0, p), (0, 0)))
        w1b_f = jnp.pad(w1b_f, ((0, p), (0, p)))
        w1c_f = jnp.pad(w1c_f, ((0, 0), (0, p)))
        b1a_f = jnp.pad(b1a_f, (0, p))
        b1b_f = jnp.pad(b1b_f, (0, p))

    w_cat = jnp.concatenate([w1a_f, w2_f], axis=0).astype(compute_dtype)
    w1b_c = w1b_f.astype(compute_dtype)
    w1c_c = w1c_f.astype(compute_dtype)
    b1a_c = b1a_f.reshape(hid_pad, 1).astype(jnp.float32)
    b1b_c = b1b_f.reshape(hid_pad, 1).astype(jnp.float32)
    b_out = (b1c + b2).reshape(Cout, 1).astype(jnp.float32)   # conv1c + conv2 bias

    return (w_cat, b1a_c, w1b_c, b1b_c, w1c_c, b_out), hid_pad


# ----------------------------------------------------------------------------
# Wrapper
# ----------------------------------------------------------------------------
def dssd_processing_module(x_nchw, params, *, t_hw=2048,
                           compute_dtype=jnp.bfloat16,
                           out_dtype=jnp.bfloat16):
    """x_nchw: (N, Cin, H, W), any float dtype.  Returns (N, Cout, H, W)."""
    N, Cin, H, W = x_nchw.shape
    folded, hid_pad = _fold_params(params, compute_dtype)
    w_cat, b1a_c, w1b_c, b1b_c, w1c_c, b_out = folded
    Cout = w1c_c.shape[0]
    HW = H * W

    # ---- spatial tile: lane-dense (multiple of 128), clamped to array/VMEM --
    if HW >= 128:
        t_hw = min(t_hw, (HW // 128) * 128)
        # Megacore (v7x has 2 TCs): keep >=2 spatial blocks for single-image
        # inference so the second core gets grid work (no-op on v5e/v6e).
        if N == 1 and HW >= 256:
            t_hw = min(t_hw, max(128, pl.cdiv(pl.cdiv(HW, 2), 128) * 128))
        # VMEM budget guard (double-buffered x/out tiles + f32 intermediates),
        # conservative for v7x's 64 MiB physical VMEM.
        bytes_per_lane = (2 * Cin * x_nchw.dtype.itemsize
                          + 2 * Cout * jnp.dtype(out_dtype).itemsize
                          + 4 * (3 * hid_pad + 2 * Cout))
        t_budget = max(128, (24 * 1024 * 1024 // bytes_per_lane) // 128 * 128)
        t_hw = max(128, min(t_hw, t_budget))
    else:
        # TODO(synk): for tiny late-pyramid maps (H*W < 128) pack several batch
        # elements into one tile to avoid masked-lane stores; full-HW block now.
        t_hw = HW

    grid = (N, pl.cdiv(HW, t_hw))        # ragged final block masked by Pallas

    # NCHW kept as-is: (N, Cin, H*W) — channels on sublanes, spatial on lanes.
    # Free reshape, native dtype: no extra HBM cast / pad / slice passes.
    x3 = x_nchw.reshape(N, Cin, HW)

    const = lambda shape: pl.BlockSpec(shape, lambda n, s: (0, 0))

    out3 = pl.pallas_call(
        _dssd_kernel,
        out_shape=jax.ShapeDtypeStruct((N, Cout, HW), out_dtype),
        grid_spec=pltpu.PrefetchScalarGridSpec(
            num_scalar_prefetch=0,
            grid=grid,
            in_specs=[
                pl.BlockSpec((1, Cin, t_hw), lambda n, s: (n, 0, s)),  # x tile
                const((hid_pad + Cout, Cin)),   # concat(conv1a, conv2) weight
                const((hid_pad, 1)),            # conv1a bias
                const((hid_pad, hid_pad)),      # conv1b weight
                const((hid_pad, 1)),            # conv1b bias
                const((Cout, hid_pad)),         # conv1c weight
                const((Cout, 1)),               # folded conv1c + conv2 bias
            ],
            out_specs=pl.BlockSpec((1, Cout, t_hw), lambda n, s: (n, 0, s)),
        ),
        compiler_params=pltpu.CompilerParams(
            dimension_semantics=("parallel", "parallel"),
            vmem_limit_bytes=32 * 1024 * 1024),
    )(x3, w_cat, b1a_c, w1b_c, b1b_c, w1c_c, b_out)

    return out3.reshape(N, Cout, H, W)


# ----------------------------------------------------------------------------
# Deterministic params for Conv2d(cin,cout,1,bias=False) + BatchNorm2d(cout)
# in eval mode: returns (weight[cin,cout], scale[cout], bias[cout]).
# (PyTorch Conv2d weight is (cout,cin,1,1); transpose+squeeze before use.)
# ----------------------------------------------------------------------------
def _make_conv_bn_params(key, cin, cout, eps=1e-5):
    k_w, k_g, k_b, k_m, k_v = jax.random.split(key, 5)
    w = jax.random.normal(k_w, (cin, cout), jnp.float32) * 0.1
    gamma = 1.0 + 0.1 * jax.random.normal(k_g, (cout,), jnp.float32)
    beta = 0.1 * jax.random.normal(k_b, (cout,), jnp.float32)
    rmean = 0.1 * jax.random.normal(k_m, (cout,), jnp.float32)
    rvar = jnp.abs(jax.random.normal(k_v, (cout,), jnp.float32)) + 0.5
    scale = gamma / jnp.sqrt(rvar + eps)
    bias = beta - rmean * scale
    return w, scale, bias


# ----------------------------------------------------------------------------
# Pure-JAX reference doing the exact same (folded, bf16-boundary) math.
# ----------------------------------------------------------------------------
def _reference(x_nchw, folded):
    w_cat, b1a, w1b, b1b, w1c, b_out = folded
    hid = b1a.shape[0]
    N, Cin, H, W = x_nchw.shape
    Cout = w1c.shape[0]
    x = x_nchw.reshape(N, Cin, H * W).astype(w_cat.dtype)

    z = jnp.einsum('oc,ncs->nos', w_cat, x, preferred_element_type=jnp.float32)
    h = jnp.maximum(z[:, :hid, :] + b1a[None], 0.0)
    resid = z[:, hid:, :]
    h = jnp.maximum(
        jnp.einsum('oc,ncs->nos', w1b, h.astype(w1b.dtype),
                   preferred_element_type=jnp.float32) + b1b[None], 0.0)
    y = jnp.einsum('oc,ncs->nos', w1c, h.astype(w1c.dtype),
                   preferred_element_type=jnp.float32) + resid + b_out[None]
    return y.reshape(N, Cout, H, W)


if __name__ == "__main__":
    # Module-consistent small shapes: in_planes=16, out_planes=32,
    # hidden_planes = out_planes // 4 = 8, spatial 16x16, batch 2.
    N, Cin, H, W = 2, 16, 16, 16
    Cout = 32
    hid = Cout // 4

    key = jax.random.PRNGKey(0)
    kx, k1a, k1b, k1c, k2 = jax.random.split(key, 5)

    x = jax.random.normal(kx, (N, Cin, H, W), jnp.float32)

    # in_planes != out_planes -> conv2 is a real conv1x1_bn residual branch.
    p1a = _make_conv_bn_params(k1a, Cin, hid)
    p1b = _make_conv_bn_params(k1b, hid, hid)
    p1c = _make_conv_bn_params(k1c, hid, Cout)
    p2 = _make_conv_bn_params(k2, Cin, Cout)
    params = (*p1a, *p1b, *p1c, *p2)

    y = dssd_processing_module(x, params)
    y = jax.block_until_ready(y)

    folded, _ = _fold_params(params)
    y_ref = _reference(x, folded)

    assert y.shape == (N, Cout, H, W)
    assert jnp.allclose(y.astype(jnp.float32), y_ref.astype(jnp.float32),
                        atol=5e-2, rtol=5e-2), "mismatch vs reference"

    print("KERNEL_OK")
</pallas_src>

<mosaic_0001>
module attributes {stable_mosaic.version = 11 : i64} {
  func.func @_dssd_kernel(%arg0: i32, %arg1: i32, %arg2: memref<1x16x256xf32, #tpu.memory_space<vmem>>, %arg3: memref<40x16xbf16, #tpu.memory_space<vmem>>, %arg4: memref<8x1xf32, #tpu.memory_space<vmem>>, %arg5: memref<8x8xbf16, #tpu.memory_space<vmem>>, %arg6: memref<8x1xf32, #tpu.memory_space<vmem>>, %arg7: memref<32x8xbf16, #tpu.memory_space<vmem>>, %arg8: memref<32x1xf32, #tpu.memory_space<vmem>>, %arg9: memref<1x32x256xbf16, #tpu.memory_space<vmem>>) attributes {dimension_semantics = [#tpu.dimension_semantics<parallel>, #tpu.dimension_semantics<parallel>], iteration_bounds = array<i64: 2, 1>, scalar_prefetch = 0 : i64, scratch_operands = 0 : i64, tpu.core_type = #tpu.core_type<tc>, window_params = [{transform_indices = @transform_0, window_bounds = array<i64: 1, 16, 256>}, {pipeline_mode = #tpu.pipeline_mode<synchronous>, transform_indices = @transform_1, window_bounds = array<i64: 40, 16>}, {pipeline_mode = #tpu.pipeline_mode<synchronous>, transform_indices = @transform_2, window_bounds = array<i64: 8, 1>}, {pipeline_mode = #tpu.pipeline_mode<synchronous>, transform_indices = @transform_3, window_bounds = array<i64: 8, 8>}, {pipeline_mode = #tpu.pipeline_mode<synchronous>, transform_indices = @transform_4, window_bounds = array<i64: 8, 1>}, {pipeline_mode = #tpu.pipeline_mode<synchronous>, transform_indices = @transform_5, window_bounds = array<i64: 32, 8>}, {pipeline_mode = #tpu.pipeline_mode<synchronous>, transform_indices = @transform_6, window_bounds = array<i64: 32, 1>}, {transform_indices = @transform_7, window_bounds = array<i64: 1, 32, 256>}]} {
    %c0 = arith.constant 0 : index
    %c0_0 = arith.constant 0 : index
    %c0_1 = arith.constant 0 : index
    %0 = vector.load %arg2[%c0, %c0_0, %c0_1] : memref<1x16x256xf32, #tpu.memory_space<vmem>>, vector<1x16x256xf32>
    %1 = vector.shape_cast %0 : vector<1x16x256xf32> to vector<16x256xf32>
    %2 = arith.truncf %1 : vector<16x256xf32> to vector<16x256xbf16>
    %c0_2 = arith.constant 0 : index
    %c0_3 = arith.constant 0 : index
    %3 = vector.load %arg3[%c0_2, %c0_3] : memref<40x16xbf16, #tpu.memory_space<vmem>>, vector<40x16xbf16>
    %cst = arith.constant dense<0.000000e+00> : vector<40x256xf32>
    %4 = tpu.matmul %3, %2, %cst {dimension_numbers = #tpu.dot_dimension_numbers<[1], [0], [0], [1], [0, 0, 1, 1], [], []>} : vector<40x16xbf16>, vector<16x256xbf16>, vector<40x256xf32> -> vector<40x256xf32>
    %5 = vector.extract_strided_slice %4 {offsets = [0, 0], sizes = [8, 256], strides = [1, 1]} : vector<40x256xf32> to vector<8x256xf32>
    %c0_4 = arith.constant 0 : index
    %c0_5 = arith.constant 0 : index
    %6 = vector.load %arg4[%c0_4, %c0_5] : memref<8x1xf32, #tpu.memory_space<vmem>>, vector<8x1xf32>
    %7 = vector.broadcast %6 : vector<8x1xf32> to vector<8x256xf32>
    %8 = arith.addf %5, %7 : vector<8x256xf32>
    %cst_6 = arith.constant 0.000000e+00 : f32
    %9 = vector.broadcast %cst_6 : f32 to vector<8x256xf32>
    %10 = arith.maximumf %8, %9 : vector<8x256xf32>
    %11 = vector.extract_strided_slice %4 {offsets = [8, 0], sizes = [32, 256], strides = [1, 1]} : vector<40x256xf32> to vector<32x256xf32>
    %c0_7 = arith.constant 0 : index
    %c0_8 = arith.constant 0 : index
    %12 = vector.load %arg5[%c0_7, %c0_8] : memref<8x8xbf16, #tpu.memory_space<vmem>>, vector<8x8xbf16>
    %13 = arith.truncf %10 : vector<8x256xf32> to vector<8x256xbf16>
    %cst_9 = arith.constant dense<0.000000e+00> : vector<8x256xf32>
    %14 = tpu.matmul %12, %13, %cst_9 {dimension_numbers = #tpu.dot_dimension_numbers<[1], [0], [0], [1], [0, 0, 1, 1], [], []>} : vector<8x8xbf16>, vector<8x256xbf16>, vector<8x256xf32> -> vector<8x256xf32>
    %c0_10 = arith.constant 0 : index
    %c0_11 = arith.constant 0 : index
    %15 = vector.load %arg6[%c0_10, %c0_11] : memref<8x1xf32, #tpu.memory_space<vmem>>, vector<8x1xf32>
    %16 = vector.broadcast %15 : vector<8x1xf32> to vector<8x256xf32>
    %17 = arith.addf %14, %16 : vector<8x256xf32>
    %cst_12 = arith.constant 0.000000e+00 : f32
    %18 = vector.broadcast %cst_12 : f32 to vector<8x256xf32>
    %19 = arith.maximumf %17, %18 : vector<8x256xf32>
    %c0_13 = arith.constant 0 : index
    %c0_14 = arith.constant 0 : index
    %20 = vector.load %arg7[%c0_13, %c0_14] : memref<32x8xbf16, #tpu.memory_space<vmem>>, vector<32x8xbf16>
    %21 = arith.truncf %19 : vector<8x256xf32> to vector<8x256xbf16>
    %cst_15 = arith.constant dense<0.000000e+00> : vector<32x256xf32>
    %22 = tpu.matmul %20, %21, %cst_15 {dimension_numbers = #tpu.dot_dimension_numbers<[1], [0], [0], [1], [0, 0, 1, 1], [], []>} : vector<32x8xbf16>, vector<8x256xbf16>, vector<32x256xf32> -> vector<32x256xf32>
    %23 = arith.addf %22, %11 : vector<32x256xf32>
    %c0_16 = arith.constant 0 : index
    %c0_17 = arith.constant 0 : index
    %24 = vector.load %arg8[%c0_16, %c0_17] : memref<32x1xf32, #tpu.memory_space<vmem>>, vector<32x1xf32>
    %25 = vector.broadcast %24 : vector<32x1xf32> to vector<32x256xf32>
    %26 = arith.addf %23, %25 : vector<32x256xf32>
    %27 = arith.truncf %26 : vector<32x256xf32> to vector<32x256xbf16>
    %c0_18 = arith.constant 0 : index
    %c0_19 = arith.constant 0 : index
    %c0_20 = arith.constant 0 : index
    %28 = vector.load %arg9[%c0_18, %c0_19, %c0_20] : memref<1x32x256xbf16, #tpu.memory_space<vmem>>, vector<1x32x256xbf16>
    %29 = vector.shape_cast %28 : vector<1x32x256xbf16> to vector<32x256xbf16>
    %30 = vector.shape_cast %27 : vector<32x256xbf16> to vector<1x32x256xbf16>
    tpu.vector_store %arg9[%c0_18, %c0_19, %c0_20], %30 {strides = array<i32>} : memref<1x32x256xbf16, #tpu.memory_space<vmem>>, vector<1x32x256xbf16>,
    return
  }
  func.func @transform_0(%arg0: i32, %arg1: i32) -> (i32, i32, i32) {
    %c0_i32 = arith.constant 0 : i32
    %c0_i32_0 = arith.constant 0 : i32
    return %arg0, %c0_i32, %arg1 : i32, i32, i32
  }
  func.func @transform_1(%arg0: i32, %arg1: i32) -> (i32, i32) {
    %c0_i32 = arith.constant 0 : i32
    %c0_i32_0 = arith.constant 0 : i32
    %c0_i32_1 = arith.constant 0 : i32
    return %c0_i32, %c0_i32_0 : i32, i32
  }
  func.func @transform_2(%arg0: i32, %arg1: i32) -> (i32, i32) {
    %c0_i32 = arith.constant 0 : i32
    %c0_i32_0 = arith.constant 0 : i32
    %c0_i32_1 = arith.constant 0 : i32
    return %c0_i32, %c0_i32_0 : i32, i32
  }
  func.func @transform_3(%arg0: i32, %arg1: i32) -> (i32, i32) {
    %c0_i32 = arith.constant 0 : i32
    %c0_i32_0 = arith.constant 0 : i32
    %c0_i32_1 = arith.constant 0 : i32
    return %c0_i32, %c0_i32_0 : i32, i32
  }
  func.func @transform_4(%arg0: i32, %arg1: i32) -> (i32, i32) {
    %c0_i32 = arith.constant 0 : i32
    %c0_i32_0 = arith.constant 0 : i32
    %c0_i32_1 = arith.constant 0 : i32
    return %c0_i32, %c0_i32_0 : i32, i32
  }
  func.func @transform_5(%arg0: i32, %arg1: i32) -> (i32, i32) {
    %c0_i32 = arith.constant 0 : i32
    %c0_i32_0 = arith.constant 0 : i32
    %c0_i32_1 = arith.constant 0 : i32
    return %c0_i32, %c0_i32_0 : i32, i32
  }
  func.func @transform_6(%arg0: i32, %arg1: i32) -> (i32, i32) {
    %c0_i32 = arith.constant 0 : i32
    %c0_i32_0 = arith.constant 0 : i32
    %c0_i32_1 = arith.constant 0 : i32
    return %c0_i32, %c0_i32_0 : i32, i32
  }
  func.func @transform_7(%arg0: i32, %arg1: i32) -> (i32, i32, i32) {
    %c0_i32 = arith.constant 0 : i32
    %c0_i32_0 = arith.constant 0 : i32
    return %arg0, %c0_i32, %arg1 : i32, i32, i32
  }
}

</mosaic_0001>

<llo_original>
// kernel: tpu_custom_call.1
$region0: #{tpu_custom_call.1}
  #allocation0 [shape = 'u32[]', space=smem, size = 0x4, offset = 0x4, fixed_abs, tag = 'smem constant byte address 0x4 - core index']
  #allocation1 [shape = 'u32[144,128]{1,0:T(1,128)}', space=vmem, size = 0x12000, scoped, tag = 'internal scratch']
  %s0 = inlined_call_operand.vmem [shape: f32[2,16,256], index: 0, kind: input, shape index: {}]
  %s1 = inlined_call_operand.vmem [shape: bf16[40,16], index: 1, kind: input, shape index: {}]
  %s2 = inlined_call_operand.vmem [shape: f32[8,1], index: 2, kind: input, shape index: {}]
  %s3 = inlined_call_operand.vmem [shape: bf16[8,8], index: 3, kind: input, shape index: {}]
  %s4 = inlined_call_operand.vmem [shape: f32[8,1], index: 4, kind: input, shape index: {}]
  %s5 = inlined_call_operand.vmem [shape: bf16[32,8], index: 5, kind: input, shape index: {}]
  %s6 = inlined_call_operand.vmem [shape: f32[32,1], index: 6, kind: input, shape index: {}]
  %s7 = inlined_call_operand.hbm [shape: bf16[2,32,256], index: 7, kind: output, shape index: {}]
  %s8 = sld [smem:[#allocation0]]
  $region61: #{tpu_custom_call.1} parent=0
    _
  %s10 = ssub.s32 1, %s8
  %s11 = scalar_select 0, %s10, %s8
  $region1: #{tpu_custom_call.1} parent=0
    #allocation2 [shape = 'u8[32768]{0}', space=vmem, size = 0x8000, scoped, tag = 'output window, operand 0']
    #allocation3 [shape = 's32[2]{0}', space=sflag, size = 0x8, scoped, tag = 'scoped memory for tpu_custom_call.1']
    %12 = vsyncpa [#allocation3], 0
    %s13 = scalar_lea.sflag [#allocation3], 1
    %14 = vsyncpa %s13, 0
    loop: start=0, step=1, limit=4
    $region2: #{tpu_custom_call.1} parent=1 // loop_pre_header
      _
    $region3: #{tpu_custom_call.1} parent=1 // loop_header
      %s16 = sphi 0, %s20
      %p17 = scmp.ge.s32.totalorder %s16, 4
      %s23 = sphi 0, %s35
      %s24 = sphi 0, %s31
      %s25 = sphi 0, %s23
      %s26 = sphi 0, %s24
      %s27 = sphi 0, %s25
      %s28 = sphi 0, %s26
      %s40 = sphi 0, %s42
      %s43 = sphi 0, %s40
      %s44 = sphi 0, %s43
      %s60 = sphi 0, %s44
      %s64 = sphi 0, %s64
      %s66 = sphi 0, %s64
      %s67 = sphi 0, %s66
      %s81 = sphi 0, %s67
      %s85 = sphi 0, %s85
      %s87 = sphi 0, %s85
      %s88 = sphi 0, %s87
      %s102 = sphi 0, %s88
      %s106 = sphi 0, %s106
      %s108 = sphi 0, %s106
      %s109 = sphi 0, %s108
      %s123 = sphi 0, %s109
      %s127 = sphi 0, %s127
      %s129 = sphi 0, %s127
      %s130 = sphi 0, %s129
      %s144 = sphi 0, %s130
      %s148 = sphi 0, %s148
      %s150 = sphi 0, %s148
      %s151 = sphi 0, %s150
      %s165 = sphi 0, %s151
      %s169 = sphi 0, %s169
      %s171 = sphi 0, %s169
      %s172 = sphi 0, %s171
      %s186 = sphi 0, %s172
      %s194 = sphi 0, %s196
      %s197 = sphi 0, %s194
      %s198 = sphi 0, %s197
      %s214 = sphi 0, %s198
    $region4: #{tpu_custom_call.1} parent=1 // loop_header_branch
      %19 = sbr.rel (%p17) target = $region8
    $region5: #{tpu_custom_call.1} parent=1 // loop_body
      %s21 = ssub.s32 %s16, 1
      %s22 = ssub.s32 %s16, 2
      %s29 = sadd.s32 1, %s24
      %p30 = scmp.ge.s32.totalorder %s29, 1
      %s31 = scalar_select %p30, 0, %s29
      %s32 = sadd.s32 1, %s23
      %s33 = scalar_select %p30, %s32, %s23
      %p34 = scmp.ge.s32.totalorder %s33, 2
      %s35 = scalar_select %p34, 0, %s33
      %s36 = ssub.s32 %s23, %s35
      %s37 = ssub.s32 %s24, %s31
      %s38 = sor.u32 %s36, %s37
      %p39 = scmp.eq.s32.totalorder %s38, 0
      %s41 = sadd.s32 %s40, 1
      %s42 = scalar_select %p39, %s40, %s41
      %p45 = pneg %p39
      %p46 = scmp.eq.s32.totalorder %s16, 1
      %p47 = por %p45, %p46
      %p48 = scmp.ne.s32.totalorder %s40, %s43
      %p49 = scmp.eq.s32.totalorder %s16, 0
      %p50 = por %p48, %p49
      %p51 = scmp.ne.s32.totalorder %s40, %s43
      %p52 = scmp.eq.s32.totalorder %s21, 1
      %p53 = por %p51, %p52
      %p54 = scmp.ne.s32.totalorder %s43, %s44
      %p55 = scmp.eq.s32.totalorder %s21, 0
      %p56 = por %p54, %p55
      %p57 = scmp.ne.s32.totalorder %s43, %s44
      %p58 = scmp.eq.s32.totalorder %s22, 1
      %p59 = por %p57, %p58
      %p61 = scmp.ne.s32.totalorder %s44, %s60
      %p62 = scmp.eq.s32.totalorder %s22, 0
      %p63 = por %p61, %p62
      %s65 = sadd.s32 %s64, 1
      %p68 = scmp.eq.s32.totalorder %s16, 1
      %p69 = scmp.ne.s32.totalorder %s64, %s66
      %p70 = scmp.eq.s32.totalorder %s16, 0
      %p71 = por %p69, %p70
      %p72 = scmp.ne.s32.totalorder %s64, %s66
      %p73 = scmp.eq.s32.totalorder %s21, 1
      %p74 = por %p72, %p73
      %p75 = scmp.ne.s32.totalorder %s66, %s67
      %p76 = scmp.eq.s32.totalorder %s21, 0
      %p77 = por %p75, %p76
      %p78 = scmp.ne.s32.totalorder %s66, %s67
      %p79 = scmp.eq.s32.totalorder %s22, 1
      %p80 = por %p78, %p79
      %p82 = scmp.ne.s32.totalorder %s67, %s81
      %p83 = scmp.eq.s32.totalorder %s22, 0
      %p84 = por %p82, %p83
      %s86 = sadd.s32 %s85, 1
      %p89 = scmp.eq.s32.totalorder %s16, 1
      %p90 = scmp.ne.s32.totalorder %s85, %s87
      %p91 = scmp.eq.s32.totalorder %s16, 0
      %p92 = por %p90, %p91
      %p93 = scmp.ne.s32.totalorder %s85, %s87
      %p94 = scmp.eq.s32.totalorder %s21, 1
      %p95 = por %p93, %p94
      %p96 = scmp.ne.s32.totalorder %s87, %s88
      %p97 = scmp.eq.s32.totalorder %s21, 0
      %p98 = por %p96, %p97
      %p99 = scmp.ne.s32.totalorder %s87, %s88
      %p100 = scmp.eq.s32.totalorder %s22, 1
      %p101 = por %p99, %p100
      %p103 = scmp.ne.s32.totalorder %s88, %s102
      %p104 = scmp.eq.s32.totalorder %s22, 0
      %p105 = por %p103, %p104
      %s107 = sadd.s32 %s106, 1
      %p110 = scmp.eq.s32.totalorder %s16, 1
      %p111 = scmp.ne.s32.totalorder %s106, %s108
      %p112 = scmp.eq.s32.totalorder %s16, 0
      %p113 = por %p111, %p112
      %p114 = scmp.ne.s32.totalorder %s106, %s108
      %p115 = scmp.eq.s32.totalorder %s21, 1
      %p116 = por %p114, %p115
      %p117 = scmp.ne.s32.totalorder %s108, %s109
      %p118 = scmp.eq.s32.totalorder %s21, 0
      %p119 = por %p117, %p118
      %p120 = scmp.ne.s32.totalorder %s108, %s109
      %p121 = scmp.eq.s32.totalorder %s22, 1
      %p122 = por %p120, %p121
      %p124 = scmp.ne.s32.totalorder %s109, %s123
      %p125 = scmp.eq.s32.totalorder %s22, 0
      %p126 = por %p124, %p125
      %s128 = sadd.s32 %s127, 1
      %p131 = scmp.eq.s32.totalorder %s16, 1
      %p132 = scmp.ne.s32.totalorder %s127, %s129
      %p133 = scmp.eq.s32.totalorder %s16, 0
      %p134 = por %p132, %p133
      %p135 = scmp.ne.s32.totalorder %s127, %s129
      %p136 = scmp.eq.s32.totalorder %s21, 1
      %p137 = por %p135, %p136
      %p138 = scmp.ne.s32.totalorder %s129, %s130
      %p139 = scmp.eq.s32.totalorder %s21, 0
      %p140 = por %p138, %p139
      %p141 = scmp.ne.s32.totalorder %s129, %s130
      %p142 = scmp.eq.s32.totalorder %s22, 1
      %p143 = por %p141, %p142
      %p145 = scmp.ne.s32.totalorder %s130, %s144
      %p146 = scmp.eq.s32.totalorder %s22, 0
      %p147 = por %p145, %p146
      %s149 = sadd.s32 %s148, 1
      %p152 = scmp.eq.s32.totalorder %s16, 1
      %p153 = scmp.ne.s32.totalorder %s148, %s150
      %p154 = scmp.eq.s32.totalorder %s16, 0
      %p155 = por %p153, %p154
      %p156 = scmp.ne.s32.totalorder %s148, %s150
      %p157 = scmp.eq.s32.totalorder %s21, 1
      %p158 = por %p156, %p157
      %p159 = scmp.ne.s32.totalorder %s150, %s151
      %p160 = scmp.eq.s32.totalorder %s21, 0
      %p161 = por %p159, %p160
      %p162 = scmp.ne.s32.totalorder %s150, %s151
      %p163 = scmp.eq.s32.totalorder %s22, 1
      %p164 = por %p162, %p163
      %p166 = scmp.ne.s32.totalorder %s151, %s165
      %p167 = scmp.eq.s32.totalorder %s22, 0
      %p168 = por %p166, %p167
      %s170 = sadd.s32 %s169, 1
      %p173 = scmp.eq.s32.totalorder %s16, 1
      %p174 = scmp.ne.s32.totalorder %s169, %s171
      %p175 = scmp.eq.s32.totalorder %s16, 0
      %p176 = por %p174, %p175
      %p177 = scmp.ne.s32.totalorder %s169, %s171
      %p178 = scmp.eq.s32.totalorder %s21, 1
      %p179 = por %p177, %p178
      %p180 = scmp.ne.s32.totalorder %s171, %s172
      %p181 = scmp.eq.s32.totalorder %s21, 0
      %p182 = por %p180, %p181
      %p183 = scmp.ne.s32.totalorder %s171, %s172
      %p184 = scmp.eq.s32.totalorder %s22, 1
      %p185 = por %p183, %p184
      %p187 = scmp.ne.s32.totalorder %s172, %s186
      %p188 = scmp.eq.s32.totalorder %s22, 0
      %p189 = por %p187, %p188
      %s190 = ssub.s32 %s23, %s35
      %s191 = ssub.s32 %s24, %s31
      %s192 = sor.u32 %s190, %s191
      %p193 = scmp.eq.s32.totalorder %s192, 0
      %s195 = sadd.s32 %s194, 1
      %s196 = scalar_select %p193, %s194, %s195
      %p199 = pneg %p193
      %p200 = scmp.eq.s32.totalorder %s16, 1
      %p201 = por %p199, %p200
      %p202 = scmp.ne.s32.totalorder %s194, %s197
      %p203 = scmp.eq.s32.totalorder %s16, 0
      %p204 = por %p202, %p203
      %p205 = scmp.ne.s32.totalorder %s194, %s197
      %p206 = scmp.eq.s32.totalorder %s21, 1
      %p207 = por %p205, %p206
      %p208 = scmp.ne.s32.totalorder %s197, %s198
      %p209 = scmp.eq.s32.totalorder %s21, 0
      %p210 = por %p208, %p209
      %p211 = scmp.ne.s32.totalorder %s197, %s198
      %p212 = scmp.eq.s32.totalorder %s22, 1
      %p213 = por %p211, %p212
      %p215 = scmp.ne.s32.totalorder %s198, %s214
      %p216 = scmp.eq.s32.totalorder %s22, 0
      %p217 = por %p215, %p216
      %p218 = scmp.le.s32.totalorder 1, %s16
      %p219 = scmp.lt.s32.totalorder %s16, 3
      %p220 = pnand %p218, %p219
      %p221 = pneg %p220
      // Predicated region
      $region9: #{tpu_custom_call.1} parent=5 // pred_check
        _
      $region10: #{tpu_custom_call.1} parent=5 // pred_check_branch
        %223 = sbr.rel (%p220) target = $region12
      $region11: #{tpu_custom_call.1} parent=5 // pred_region
        %s224 = ssub.s32 %s16, 1
        // Predicated region
        $region13: #{tpu_custom_call.1} parent=11 // pred_check
          %p225 = pneg %p77
        $region14: #{tpu_custom_call.1} parent=11 // pred_check_branch
          %227 = sbr.rel (%p225) target = $region16
        $region15: #{tpu_custom_call.1} parent=11 // pred_region
          _
        $region16: #{tpu_custom_call.1} parent=11 // pred_fallthru
          _
        // Predicated region
        $region17: #{tpu_custom_call.1} parent=11 // pred_check
          %p228 = pneg %p98
        $region18: #{tpu_custom_call.1} parent=11 // pred_check_branch
          %230 = sbr.rel (%p228) target = $region20
        $region19: #{tpu_custom_call.1} parent=11 // pred_region
          _
        $region20: #{tpu_custom_call.1} parent=11 // pred_fallthru
          _
        // Predicated region
        $region21: #{tpu_custom_call.1} parent=11 // pred_check
          %p231 = pneg %p119
        $region22: #{tpu_custom_call.1} parent=11 // pred_check_branch
          %233 = sbr.rel (%p231) target = $region24
        $region23: #{tpu_custom_call.1} parent=11 // pred_region
          _
        $region24: #{tpu_custom_call.1} parent=11 // pred_fallthru
          _
        // Predicated region
        $region25: #{tpu_custom_call.1} parent=11 // pred_check
          %p234 = pneg %p140
        $region26: #{tpu_custom_call.1} parent=11 // pred_check_branch
          %236 = sbr.rel (%p234) target = $region28
        $region27: #{tpu_custom_call.1} parent=11 // pred_region
          _
        $region28: #{tpu_custom_call.1} parent=11 // pred_fallthru
          _
        // Predicated region
        $region29: #{tpu_custom_call.1} parent=11 // pred_check
          %p237 = pneg %p161
        $region30: #{tpu_custom_call.1} parent=11 // pred_check_branch
          %239 = sbr.rel (%p237) target = $region32
        $region31: #{tpu_custom_call.1} parent=11 // pred_region
          _
        $region32: #{tpu_custom_call.1} parent=11 // pred_fallthru
          _
        // Predicated region
        $region33: #{tpu_custom_call.1} parent=11 // pred_check
          %p240 = pneg %p182
        $region34: #{tpu_custom_call.1} parent=11 // pred_check_branch
          %242 = sbr.rel (%p240) target = $region36
        $region35: #{tpu_custom_call.1} parent=11 // pred_region
          _
        $region36: #{tpu_custom_call.1} parent=11 // pred_fallthru
          _
      $region12: #{tpu_custom_call.1} parent=5 // pred_fallthru
        _
      %p243 = scmp.lt.s32.totalorder %s16, 2
      // Predicated region
      $region37: #{tpu_custom_call.1} parent=5 // pred_check
        %p244 = pneg %p243
      $region38: #{tpu_custom_call.1} parent=5 // pred_check_branch
        %246 = sbr.rel (%p244) target = $region40
      $region39: #{tpu_custom_call.1} parent=5 // pred_region
        // Predicated region
        $region41: #{tpu_custom_call.1} parent=39 // pred_check
          %p247 = pneg %p50
        $region42: #{tpu_custom_call.1} parent=39 // pred_check_branch
          %249 = sbr.rel (%p247) target = $region44
        $region43: #{tpu_custom_call.1} parent=39 // pred_region
          %s250 = smul.u32 2, %s24
          %p251 = scmp.lt.s32.totalorder %s23, 1
          %s252 = scalar_select %p251, %s23, 1
          %p253 = scmp.lt.s32.totalorder %s250, 1
          %s254 = scalar_select %p253, %s250, 1
          %s255 = smul.addr %s252, 4
          %s256 = sadd.s32 %s254, %s255
          %s257 = smul.addr %s256, 8
          %s258 = scalar_lea.vmem %s0, %s257
          %s259 = smul.u32 2, %s24
        $region44: #{tpu_custom_call.1} parent=39 // pred_fallthru
          _
      $region40: #{tpu_custom_call.1} parent=5 // pred_fallthru
        _
      %p260 = scmp.le.s32.totalorder 1, %s16
      %p261 = scmp.lt.s32.totalorder %s16, 3
      %p262 = pnand %p260, %p261
      %p263 = pneg %p262
      // Predicated region
      $region45: #{tpu_custom_call.1} parent=5 // pred_check
        _
      $region46: #{tpu_custom_call.1} parent=5 // pred_check_branch
        %265 = sbr.rel (%p262) target = $region48
      $region47: #{tpu_custom_call.1} parent=5 // pred_region
        %s266 = ssub.s32 %s16, 1
        %s267 = smul.u32 2, %s26
        %p268 = scmp.lt.s32.totalorder %s25, 1
        %s269 = scalar_select %p268, %s25, 1
        %p270 = scmp.lt.s32.totalorder %s267, 1
        %s271 = scalar_select %p270, %s267, 1
        %s272 = smul.addr %s269, 4
        %s273 = sadd.s32 %s271, %s272
        %s274 = smul.addr %s273, 8
        %s275 = scalar_lea.vmem %s0, %s274
        %p276 = pneg %p56
        %p277 = pneg %p53
        %p278 = pneg %p77
        %p279 = pneg %p74
        %p280 = pneg %p98
        %p281 = pneg %p95
        %p282 = pneg %p119
        %p283 = pneg %p116
        %p284 = pneg %p140
        %p285 = pneg %p137
        %p286 = pneg %p161
        %p287 = pneg %p158
        %p288 = pneg %p182
        %p289 = pneg %p179
        %p290 = pneg %p210
        %p291 = pneg %p207
        %s292 = sand.u32 %s197, 1
        %s293 = scalar_lea.sflag [#allocation3], %s292
        %s294 = sand.u32 %s197, 1
        %s295 = smul.addr %s294, 32
        %s296 = scalar_lea.vmem [#allocation2], %s295
        %s297 = smul.u32 2, %s26
        %p298 = scmp.lt.s32.totalorder %s25, 1
        %s299 = scalar_select %p298, %s25, 1
        %p300 = scmp.lt.s32.totalorder %s297, 1
        %s301 = scalar_select %p300, %s297, 1
        %s302 = smul.addr %s299, 4
        %s303 = sadd.s32 %s301, %s302
        %s304 = smul.addr %s303, 8
        %s305 = scalar_lea.vmem %s0, %s304
        %s306 = smul.u32 2, %s26
        %s307 = smul.u32 2, %s26
        %v309 = vld [vmem:[%s305] sm:$0xff]
        %v310 = vld [vmem:[%s305 + $0x8] sm:$0xff]
        %v311 = vld [vmem:[%s305 + $0x10] sm:$0xff]
        %v312 = vld [vmem:[%s305 + $0x18] sm:$0xff]
        %v313 = vpack.c.bf16 %v311, %v309
        %v314 = vpack.c.bf16 %v312, %v310
        %v315 = vld [vmem:[%s1] sm:$0xf]
        %v316 = vld [vmem:[%s1 + $0x4] sm:$0xf]
        %v317 = vld [vmem:[%s1 + $0x8] sm:$0xf]
        %v318 = vld [vmem:[%s1 + $0xc] sm:$0xf]
        %v319 = vld [vmem:[%s1 + $0x10] sm:$0xf]
        %v325 = vunpack.c.l.b16 %v315
        %v326 = vunpack.c.l.b16 %v316
        %v327 = vunpack.c.l.b16 %v317
        %v328 = vunpack.c.l.b16 %v318
        %v329 = vunpack.c.l.b16 %v319
        %v330 = vpack.c.b16 %v326, %v325
        %v331 = vpack.c.b16 %v328, %v327
        %v332 = vpack.c.b16 %v329, %v329
        %vm333 = vcmask 130048
        %v335 = vsel %vm333, %v330, 0
        %v338 = vsel %vm333, %v331, 0
        %v341 = vsel %vm333, %v332, 0
        %343 = vmatprep.subr.bf16.mxu0 %v314
        %344 = vmatpush1.bf16.msra.mxu0 %v313
        %345 = vmatprep.subr.bf16.mxu0 0
        %346 = vmatpush1.bf16.msra.mxu0 0
        %347 = vmatprep.subr.bf16.mxu0 0
        %348 = vmatpush1.bf16.msra.mxu0 0
        %349 = vmatprep.subr.bf16.mxu0 0
        %350 = vmatpush1.bf16.msra.mxu0 0
        %351 = vmatprep.subr.bf16.mxu0 0
        %352 = vmatpush1.bf16.msra.mxu0 0
        %353 = vmatprep.subr.bf16.mxu0 0
        %354 = vmatpush1.bf16.msra.mxu0 0
        %355 = vmatprep.subr.bf16.mxu0 0
        %356 = vmatpush1.bf16.msra.mxu0 0
        %357 = vmatprep.subr.bf16.mxu0 0
        %358 = vmatpush1.bf16.msra.mxu0 0
        %359 = vmatprep.subr.bf16.mxu0 0
        %360 = vmatpush1.bf16.msra.mxu0 0
        %361 = vmatprep.subr.bf16.mxu0 0
        %362 = vmatpush1.bf16.msra.mxu0 0
        %363 = vmatprep.subr.bf16.mxu0 0
        %364 = vmatpush1.bf16.msra.mxu0 0
        %365 = vmatprep.subr.bf16.mxu0 0
        %366 = vmatpush1.bf16.msra.mxu0 0
        %367 = vmatprep.subr.bf16.mxu0 0
        %368 = vmatpush1.bf16.msra.mxu0 0
        %369 = vmatprep.subr.bf16.mxu0 0
        %370 = vmatpush1.bf16.msra.mxu0 0
        %371 = vmatprep.subr.bf16.mxu0 0
        %372 = vmatpush1.bf16.msra.mxu0 0
        %373 = vmatprep.subr.bf16.mxu0 0
        %374 = vmatpush1.bf16.msra.mxu0 0
        %375 = vmatprep.mubr.bf16.mxu0 0
        %376 = vmatmul.mubr.bf16.gmra.mrb[0].mxu0 %v335
        %v377 = vpop.f32.mrb[0].mxu0
        %v378 = vadd.f32 0.0, %v377
        %v379 = vpop.f32.mrb[0].mxu0
        %v380 = vadd.f32 0.0, %v379
        %v381 = vpop.f32.mrb[0].mxu0
        %v382 = vadd.f32 0.0, %v381
        %v383 = vpop.f32.mrb[0].mxu0
        %v384 = vadd.f32 0.0, %v383
        %385 = vmatprep.mubr.bf16.mxu0 0
        %386 = vmatmul.mubr.bf16.gmra.mrb[0].mxu0 %v338
        %v387 = vpop.f32.mrb[0].mxu0
        %v388 = vadd.f32 0.0, %v387
        %v389 = vpop.f32.mrb[0].mxu0
        %v390 = vadd.f32 0.0, %v389
        %v391 = vpop.f32.mrb[0].mxu0
        %v392 = vadd.f32 0.0, %v391
        %v393 = vpop.f32.mrb[0].mxu0
        %v394 = vadd.f32 0.0, %v393
        %395 = vmatprep.mubr.bf16.mxu0 0
        %396 = vmatmul.mubr.bf16.gmra.mrb[0].mxu0 %v341
        %v397 = vpop.f32.mrb[0].mxu0
        %v398 = vadd.f32 0.0, %v397
        %v399 = vpop.f32.mrb[0].mxu0
        %v400 = vadd.f32 0.0, %v399
        %v401 = vpop.f32.mrb[0].mxu0
        %v402 = vpop.f32.mrb[0].mxu0
        %403 = vdwg.mxu0
        %v404 = vld [vmem:[%s2] sm:$0xff]
        %406 = vset.pattern.permute.xlu0 0
        %407 = vperm.xlu0 %406, %v404
        %v408 = vpop.permute.xlu0 %407
        %v410 = vadd.f32 %v378, %v408
        %v411 = vadd.f32 %v380, %v408
        %v412 = vmax.f32 %v410, 0.0
        %v413 = vmax.f32 %v411, 0.0
        %v414 = vld [vmem:[%s3] sm:$0xf]
        %v415 = vpack.c.bf16 %v412, %v412
        %v416 = vpack.c.bf16 %v413, %v413
        %v417 = vld [vmem:[%s4] sm:$0xff]
        %419 = vset.pattern.permute.xlu0 0
        %420 = vperm.xlu0 %419, %v417
        %v421 = vpop.permute.xlu0 %420
        %vm423 = vcmask 64512
        %v425 = vsel %vm423, %v414, 0
        %vm427 = vcmask 1043456
        %v429 = vsel %vm427, %v415, 0
        %v432 = vsel %vm427, %v416, 0
        %434 = vmatprep.subr.bf16.mxu0 %v432
        %435 = vmatpush1.bf16.msra.mxu0 %v429
        %436 = vmatprep.subr.bf16.mxu0 0
        %437 = vmatpush1.bf16.msra.mxu0 0
        %438 = vmatprep.subr.bf16.mxu0 0
        %439 = vmatpush1.bf16.msra.mxu0 0
        %440 = vmatprep.subr.bf16.mxu0 0
        %441 = vmatpush1.bf16.msra.mxu0 0
        %442 = vmatprep.subr.bf16.mxu0 0
        %443 = vmatpush1.bf16.msra.mxu0 0
        %444 = vmatprep.subr.bf16.mxu0 0
        %445 = vmatpush1.bf16.msra.mxu0 0
        %446 = vmatprep.subr.bf16.mxu0 0
        %447 = vmatpush1.bf16.msra.mxu0 0
        %448 = vmatprep.subr.bf16.mxu0 0
        %449 = vmatpush1.bf16.msra.mxu0 0
        %450 = vmatprep.subr.bf16.mxu0 0
        %451 = vmatpush1.bf16.msra.mxu0 0
        %452 = vmatprep.subr.bf16.mxu0 0
        %453 = vmatpush1.bf16.msra.mxu0 0
        %454 = vmatprep.subr.bf16.mxu0 0
        %455 = vmatpush1.bf16.msra.mxu0 0
        %456 = vmatprep.subr.bf16.mxu0 0
        %457 = vmatpush1.bf16.msra.mxu0 0
        %458 = vmatprep.subr.bf16.mxu0 0
        %459 = vmatpush1.bf16.msra.mxu0 0
        %460 = vmatprep.subr.bf16.mxu0 0
        %461 = vmatpush1.bf16.msra.mxu0 0
        %462 = vmatprep.subr.bf16.mxu0 0
        %463 = vmatpush1.bf16.msra.mxu0 0
        %464 = vmatprep.subr.bf16.mxu0 0
        %465 = vmatpush1.bf16.msra.mxu0 0
        %466 = vmatprep.mubr.bf16.mxu0 0
        %467 = vmatmul.mubr.bf16.gmra.mrb[0].mxu0 %v425
        %v468 = vpop.f32.mrb[0].mxu0
        %v469 = vadd.f32 %v421, %v468
        %v470 = vpop.f32.mrb[0].mxu0
        %v471 = vadd.f32 %v421, %v470
        %v472 = vpop.f32.mrb[0].mxu0
        %v473 = vpop.f32.mrb[0].mxu0
        %474 = vdwg.mxu0
        %v475 = vmax.f32 %v469, 0.0
        %v476 = vmax.f32 %v471, 0.0
        %v477 = vld [vmem:[%s5] sm:$0xf]
        %v478 = vld [vmem:[%s5 + $0x4] sm:$0xf]
        %v479 = vld [vmem:[%s5 + $0x8] sm:$0xf]
        %v480 = vld [vmem:[%s5 + $0xc] sm:$0xf]
        %v481 = vpack.c.bf16 %v475, %v475
        %v482 = vpack.c.bf16 %v476, %v476
        %v487 = vunpack.c.l.b16 %v477
        %v488 = vunpack.c.l.b16 %v478
        %v489 = vunpack.c.l.b16 %v479
        %v490 = vunpack.c.l.b16 %v480
        %v491 = vpack.c.b16 %v488, %v487
        %v492 = vpack.c.b16 %v490, %v489
        %v494 = vsel %vm423, %v491, 0
        %v497 = vsel %vm423, %v492, 0
        %v500 = vsel %vm427, %v481, 0
        %v503 = vsel %vm427, %v482, 0
        %505 = vmatprep.subr.bf16.mxu0 %v503
        %506 = vmatpush1.bf16.msra.mxu0 %v500
        %507 = vmatprep.subr.bf16.mxu0 0
        %508 = vmatpush1.bf16.msra.mxu0 0
        %509 = vmatprep.subr.bf16.mxu0 0
        %510 = vmatpush1.bf16.msra.mxu0 0
        %511 = vmatprep.subr.bf16.mxu0 0
        %512 = vmatpush1.bf16.msra.mxu0 0
        %513 = vmatprep.subr.bf16.mxu0 0
        %514 = vmatpush1.bf16.msra.mxu0 0
        %515 = vmatprep.subr.bf16.mxu0 0
        %516 = vmatpush1.bf16.msra.mxu0 0
        %517 = vmatprep.subr.bf16.mxu0 0
        %518 = vmatpush1.bf16.msra.mxu0 0
        %519 = vmatprep.subr.bf16.mxu0 0
        %520 = vmatpush1.bf16.msra.mxu0 0
        %521 = vmatprep.subr.bf16.mxu0 0
        %522 = vmatpush1.bf16.msra.mxu0 0
        %523 = vmatprep.subr.bf16.mxu0 0
        %524 = vmatpush1.bf16.msra.mxu0 0
        %525 = vmatprep.subr.bf16.mxu0 0
        %526 = vmatpush1.bf16.msra.mxu0 0
        %527 = vmatprep.subr.bf16.mxu0 0
        %528 = vmatpush1.bf16.msra.mxu0 0
        %529 = vmatprep.subr.bf16.mxu0 0
        %530 = vmatpush1.bf16.msra.mxu0 0
        %531 = vmatprep.subr.bf16.mxu0 0
        %532 = vmatpush1.bf16.msra.mxu0 0
        %533 = vmatprep.subr.bf16.mxu0 0
        %534 = vmatpush1.bf16.msra.mxu0 0
        %535 = vmatprep.subr.bf16.mxu0 0
        %536 = vmatpush1.bf16.msra.mxu0 0
        %537 = vmatprep.mubr.bf16.mxu0 0
        %538 = vmatmul.mubr.bf16.gmra.mrb[0].mxu0 %v494
        %v539 = vpop.f32.mrb[0].mxu0
        %v540 = vadd.f32 %v382, %v539
        %v541 = vpop.f32.mrb[0].mxu0
        %v542 = vadd.f32 %v384, %v541
        %v543 = vpop.f32.mrb[0].mxu0
        %v544 = vadd.f32 %v388, %v543
        %v545 = vpop.f32.mrb[0].mxu0
        %v546 = vadd.f32 %v390, %v545
        %547 = vmatprep.mubr.bf16.mxu0 0
        %548 = vmatmul.mubr.bf16.gmra.mrb[0].mxu0 %v497
        %v549 = vpop.f32.mrb[0].mxu0
        %v550 = vadd.f32 %v392, %v549
        %v551 = vpop.f32.mrb[0].mxu0
        %v552 = vadd.f32 %v394, %v551
        %v553 = vpop.f32.mrb[0].mxu0
        %v554 = vadd.f32 %v398, %v553
        %v555 = vpop.f32.mrb[0].mxu0
        %v556 = vadd.f32 %v400, %v555
        %557 = vdwg.mxu0
        %v558 = vld [vmem:[%s6] sm:$0xff]
        %v559 = vld [vmem:[%s6 + $0x8] sm:$0xff]
        %v560 = vld [vmem:[%s6 + $0x10] sm:$0xff]
        %v561 = vld [vmem:[%s6 + $0x18] sm:$0xff]
        %563 = vset.pattern.permute.xlu0 0
        %564 = vperm.xlu0 %563, %v558
        %v565 = vpop.permute.xlu0 %564
        %568 = vset.pattern.permute.xlu0 0
        %569 = vperm.xlu0 %568, %v559
        %v570 = vpop.permute.xlu0 %569
        %573 = vset.pattern.permute.xlu0 0
        %574 = vperm.xlu0 %573, %v560
        %v575 = vpop.permute.xlu0 %574
        %578 = vset.pattern.permute.xlu0 0
        %579 = vperm.xlu0 %578, %v561
        %v580 = vpop.permute.xlu0 %579
        %v582 = vadd.f32 %v540, %v565
        %v583 = vadd.f32 %v542, %v565
        %v584 = vadd.f32 %v544, %v570
        %v585 = vadd.f32 %v546, %v570
        %v586 = vadd.f32 %v550, %v575
        %v587 = vadd.f32 %v552, %v575
        %v588 = vadd.f32 %v554, %v580
        %v589 = vadd.f32 %v556, %v580
        %v590 = vpack.c.bf16 %v584, %v582
        %v591 = vpack.c.bf16 %v585, %v583
        %v592 = vpack.c.bf16 %v588, %v586
        %v593 = vpack.c.bf16 %v589, %v587
        %v598 = vunpack.c.l.b16 %v590
        %v599 = vunpack.c.l.b16 %v591
        %v600 = vunpack.c.h.b16 %v590
        %v601 = vunpack.c.h.b16 %v591
        %v602 = vunpack.c.l.b16 %v592
        %v603 = vunpack.c.l.b16 %v593
        %v604 = vunpack.c.h.b16 %v592
        %v605 = vunpack.c.h.b16 %v593
        %v606 = vpack.c.b16 %v599, %v598
        %v607 = vpack.c.b16 %v601, %v600
        %v608 = vpack.c.b16 %v603, %v602
        %v609 = vpack.c.b16 %v605, %v604
        %614 = vst [vmem:[%s296] sm:$0xff] %v606
        %615 = vst [vmem:[%s296 + $0x8] sm:$0xff] %v607
        %616 = vst [vmem:[%s296 + $0x10] sm:$0xff] %v608
        %617 = vst [vmem:[%s296 + $0x18] sm:$0xff] %v609
        %s618 = sand.u32 %s197, 1
        %s619 = scalar_lea.sflag [#allocation3], %s618
        %s620 = sand.u32 %s197, 1
        %s621 = smul.addr %s620, 32
        %s622 = scalar_lea.vmem [#allocation2], %s621
        // Predicated region
        $region49: #{tpu_custom_call.1} parent=47 // pred_check
          %p623 = pneg %p207
        $region50: #{tpu_custom_call.1} parent=47 // pred_check_branch
          %625 = sbr.rel (%p623) target = $region52
        $region51: #{tpu_custom_call.1} parent=47 // pred_region
          %s626 = smul.u32 2, %s26
          %s628 = ssub.s32 512, 512
          %629 = vsyncadd %s619, %s628
          %s630 = smul.addr %s25, 8
          %s631 = sadd.s32 %s626, %s630
          %s632 = smul.addr %s631, 64
          %s633 = scalar_lea.hbm %s7, %s632
          %s634 = sshll.u32 %s622, 4
          %s635 = int_to_ptr.vmem [resolvable:$true] %s634
          %640 = dma.vmem_to_hbm [thread:$0]  %s635, 512, %s633, %s619, 128, 128, 8
        $region52: #{tpu_custom_call.1} parent=47 // pred_fallthru
          _
      $region48: #{tpu_custom_call.1} parent=5 // pred_fallthru
        _
      %p641 = scmp.le.s32.totalorder 2, %s16
      // Predicated region
      $region53: #{tpu_custom_call.1} parent=5 // pred_check
        %p642 = pneg %p641
      $region54: #{tpu_custom_call.1} parent=5 // pred_check_branch
        %644 = sbr.rel (%p642) target = $region56
      $region55: #{tpu_custom_call.1} parent=5 // pred_region
        %s645 = ssub.s32 %s16, 2
        // Predicated region
        $region57: #{tpu_custom_call.1} parent=55 // pred_check
          %p646 = pneg %p213
        $region58: #{tpu_custom_call.1} parent=55 // pred_check_branch
          %648 = sbr.rel (%p646) target = $region60
        $region59: #{tpu_custom_call.1} parent=55 // pred_region
          %s649 = sand.u32 %s198, 1
          %s650 = scalar_lea.sflag [#allocation3], %s649
          %s651 = sand.u32 %s198, 1
          %s652 = smul.addr %s651, 32
          %s653 = scalar_lea.vmem [#allocation2], %s652
          %654 = dma.done %s650, 512
        $region60: #{tpu_custom_call.1} parent=55 // pred_fallthru
          _
      $region56: #{tpu_custom_call.1} parent=5 // pred_fallthru
        _
    $region6: #{tpu_custom_call.1} parent=1 // loop_footer
      %s20 = sadd.s32 1, %s16
    $region7: #{tpu_custom_call.1} parent=1 // loop_footer_branch
      %15 = sbr.rel target = $region3
    $region8: #{tpu_custom_call.1} parent=1 // loop_exit
      _
    %655 = vsyncpa [#allocation3], 1
    %s656 = scalar_lea.sflag [#allocation3], 1
    %657 = vsyncpa %s656, 1

</llo_original>
